<compile_context>
chip_gen: v7x
topology: tpu7x:2x2x1
jax: 0.10.0
libtpu: 0.0.40
codegen_flags: <defaults>
</compile_context>

<pallas_src>
import functools

import jax
import jax.numpy as jnp
from jax.experimental import pallas as pl
from jax.experimental.pallas import tpu as pltpu

_LANES = 128  # vreg lane width; batch samples live on the lane axis.


def _mlp_kernel(x_ref, w1_ref, b1_ref, w2_ref, b2_ref, w3_ref, b3_ref, o_ref):
    """x_ref: (3, TILE_ROWS, 128) VMEM; o_ref: (2, TILE_ROWS, 128) VMEM.

    Features sit on the tiny leading axis; batch samples fill the
    (sublane, lane) = (TILE_ROWS, 128) slab so every VPU/EUP op processes
    full 1024-element vregs.  Weights/biases are SMEM scalars.
    """
    x0 = x_ref[0]            # (TILE_ROWS, 128)
    x1 = x_ref[1]
    x2 = x_ref[2]

    # linear1 (3 -> 3) + sigmoid: unrolled scalar*slab FMAs on the VPU.
    h1 = []
    for j in range(3):
        z = (w1_ref[j, 0] * x0 + w1_ref[j, 1] * x1 + w1_ref[j, 2] * x2
             + b1_ref[j])
        h1.append(jax.nn.sigmoid(z))

    # linear2 (3 -> 2) + relu.
    h2 = []
    for j in range(2):
        z = (w2_ref[j, 0] * h1[0] + w2_ref[j, 1] * h1[1]
             + w2_ref[j, 2] * h1[2] + b2_ref[j])
        h2.append(jnp.maximum(z, 0.0))

    # output (2 -> 2) + softmax(dim=-1).  Exact 2-class identity:
    #   softmax([l0, l1]) == [sigmoid(l0 - l1), 1 - sigmoid(l0 - l1)]
    l0 = w3_ref[0, 0] * h2[0] + w3_ref[0, 1] * h2[1] + b3_ref[0]
    l1 = w3_ref[1, 0] * h2[0] + w3_ref[1, 1] * h2[1] + b3_ref[1]
    p0 = jax.nn.sigmoid(l0 - l1)

    # Direct per-class stores (no sublane concatenate / relayout).
    o_ref[0] = p0
    o_ref[1] = 1.0 - p0


def mlp_reference(x, params):
    """Pure-JAX reference; also the small-batch fast path.  x: (B, 3)."""
    w1, b1, w2, b2, w3, b3 = params
    h1 = jax.nn.sigmoid(x @ w1.T + b1)
    h2 = jnp.maximum(h1 @ w2.T + b2, 0.0)
    return jax.nn.softmax(h2 @ w3.T + b3, axis=-1)


def _forward_feature_major_padded(x_fm, params, tile_rows):
    """Core Pallas path.  x_fm: (3, B) feature-major -> (2, B) probabilities."""
    assert tile_rows > 0 and tile_rows % 8 == 0, (
        "tile_rows must be a positive multiple of 8 (sublane tiling)")
    w1, b1, w2, b2, w3, b3 = params

    B = x_fm.shape[1]
    tile_b = tile_rows * _LANES                 # samples per grid step
    B_pad = tile_b * pl.cdiv(B, tile_b)
    if B_pad != B:
        x_fm = jnp.pad(x_fm, ((0, 0), (0, B_pad - B)))
    n_rows = B_pad // _LANES

    # Free (contiguous) reshape to the sublane/lane-dense 3D layout.
    x3 = x_fm.reshape(3, n_rows, _LANES)

    smem = pl.BlockSpec(memory_space=pltpu.MemorySpace.SMEM)
    out3 = pl.pallas_call(
        _mlp_kernel,
        out_shape=jax.ShapeDtypeStruct((2, n_rows, _LANES), jnp.float32),
        grid=(n_rows // tile_rows,),
        in_specs=[
            pl.BlockSpec((3, tile_rows, _LANES), lambda i: (0, i, 0)),  # x tile
            smem, smem, smem, smem, smem, smem,       # weights / biases (SMEM)
        ],
        out_specs=pl.BlockSpec((2, tile_rows, _LANES), lambda i: (0, i, 0)),
        compiler_params=pltpu.CompilerParams(
            dimension_semantics=("parallel",)),       # megacore-shardable
    )(x3, w1, b1, w2, b2, w3, b3)

    return out3.reshape(2, B_pad)[:, :B]


@functools.partial(jax.jit, static_argnames=("tile_rows",))
def model_demo_forward_feature_major(x_fm, params, *, tile_rows=1024):
    """Feature-major interface: x_fm (3, B) -> (2, B).  No wrapper transposes."""
    return _forward_feature_major_padded(x_fm, params, tile_rows)


@functools.partial(jax.jit, static_argnames=("tile_rows", "min_pallas_batch"))
def model_demo_forward(x, params, *, tile_rows=1024, min_pallas_batch=65536):
    """PyTorch-layout interface: x (B, 3) float32 -> (B, 2) softmax probs."""
    B = x.shape[0]
    # Small/medium batches: pallas_call launch + the layout change dominate;
    # let XLA fuse the whole MLP instead.
    if B < min_pallas_batch:
        return mlp_reference(x, params)
    # Single fused pad+transpose to the feature-major layout, then back.
    out_fm = _forward_feature_major_padded(x.T, params, tile_rows)
    return out_fm.T


def init_params(key):
    """Deterministic init mirroring the PyTorch module's __init__ shapes.

    linear1: weight (3,3) xavier_normal, bias (3,) zeros
    linear2: weight (2,3) kaiming_normal(relu), bias (2,) zeros
    output : weight (2,2) torch-default-like init, bias (2,)
    """
    k1, k2, k3, k4 = jax.random.split(key, 4)

    w1 = jax.random.normal(k1, (3, 3), jnp.float32) * jnp.sqrt(2.0 / (3 + 3))
    b1 = jnp.zeros((3,), jnp.float32)

    w2 = jax.random.normal(k2, (2, 3), jnp.float32) * jnp.sqrt(2.0 / 3)
    b2 = jnp.zeros((2,), jnp.float32)

    bound = 1.0 / jnp.sqrt(2.0)
    w3 = jax.random.uniform(k3, (2, 2), jnp.float32, -bound, bound)
    b3 = jax.random.uniform(k4, (2,), jnp.float32, -bound, bound)

    return (w1, b1, w2, b2, w3, b3)


if __name__ == "__main__":
    key = jax.random.PRNGKey(0)
    pkey, xkey = jax.random.split(key)
    params = init_params(pkey)

    # Small demo shapes: tile_rows=8 -> 8*128 = 1024 samples per grid step;
    # B=1900 pads to 2048 and runs a 2-step grid (exercises tiling + padding)
    # while total data stays tiny (~22 KiB).
    B = 1900
    demo_tile_rows = 8
    x = jax.random.normal(xkey, (B, 3), jnp.float32)

    ref = jax.block_until_ready(mlp_reference(x, params))

    # (B, 3) PyTorch-layout interface (min_pallas_batch=0 forces Pallas here).
    out = jax.block_until_ready(
        model_demo_forward(x, params, tile_rows=demo_tile_rows,
                           min_pallas_batch=0))
    assert out.shape == (B, 2)
    assert bool(jnp.allclose(jnp.sum(out, axis=-1), 1.0, atol=1e-5))
    assert bool(jnp.allclose(out, ref, atol=1e-5, rtol=1e-5))

    # Feature-major end-to-end interface (zero wrapper relayouts).
    out_fm = jax.block_until_ready(
        model_demo_forward_feature_major(x.T, params,
                                         tile_rows=demo_tile_rows))
    assert out_fm.shape == (2, B)
    assert bool(jnp.allclose(out_fm, ref.T, atol=1e-5, rtol=1e-5))

    # Tiny-batch fast path (no Pallas dispatch) stays numerically identical.
    out_small = jax.block_until_ready(model_demo_forward(x[:8], params))
    assert bool(jnp.allclose(out_small, mlp_reference(x[:8], params),
                             atol=1e-6, rtol=1e-6))

    print("KERNEL_OK")
</pallas_src>

<mosaic_0001>
module attributes {stable_mosaic.version = 11 : i64} {
  func.func @_mlp_kernel(%arg0: i32, %arg1: memref<3x8x128xf32, #tpu.memory_space<vmem>>, %arg2: memref<3x3xf32, #tpu.memory_space<smem>>, %arg3: memref<3xf32, #tpu.memory_space<smem>>, %arg4: memref<2x3xf32, #tpu.memory_space<smem>>, %arg5: memref<2xf32, #tpu.memory_space<smem>>, %arg6: memref<2x2xf32, #tpu.memory_space<smem>>, %arg7: memref<2xf32, #tpu.memory_space<smem>>, %arg8: memref<2x8x128xf32, #tpu.memory_space<vmem>>) attributes {dimension_semantics = [#tpu.dimension_semantics<parallel>], iteration_bounds = array<i64: 2>, scalar_prefetch = 0 : i64, scratch_operands = 0 : i64, tpu.core_type = #tpu.core_type<tc>, window_params = [{transform_indices = @transform_0, window_bounds = array<i64: 3, 8, 128>}, {transform_indices = @transform_1, window_bounds = array<i64: 3, 3>}, {transform_indices = @transform_2, window_bounds = array<i64: 3>}, {transform_indices = @transform_3, window_bounds = array<i64: 2, 3>}, {transform_indices = @transform_4, window_bounds = array<i64: 2>}, {transform_indices = @transform_5, window_bounds = array<i64: 2, 2>}, {transform_indices = @transform_6, window_bounds = array<i64: 2>}, {transform_indices = @transform_7, window_bounds = array<i64: 2, 8, 128>}]} {
    %c0 = arith.constant 0 : index
    %c0_0 = arith.constant 0 : index
    %c0_1 = arith.constant 0 : index
    %0 = vector.load %arg1[%c0, %c0_0, %c0_1] : memref<3x8x128xf32, #tpu.memory_space<vmem>>, vector<1x8x128xf32>
    %1 = vector.shape_cast %0 : vector<1x8x128xf32> to vector<8x128xf32>
    %c1 = arith.constant 1 : index
    %c0_2 = arith.constant 0 : index
    %c0_3 = arith.constant 0 : index
    %2 = vector.load %arg1[%c1, %c0_2, %c0_3] : memref<3x8x128xf32, #tpu.memory_space<vmem>>, vector<1x8x128xf32>
    %3 = vector.shape_cast %2 : vector<1x8x128xf32> to vector<8x128xf32>
    %c2 = arith.constant 2 : index
    %c0_4 = arith.constant 0 : index
    %c0_5 = arith.constant 0 : index
    %4 = vector.load %arg1[%c2, %c0_4, %c0_5] : memref<3x8x128xf32, #tpu.memory_space<vmem>>, vector<1x8x128xf32>
    %5 = vector.shape_cast %4 : vector<1x8x128xf32> to vector<8x128xf32>
    %c0_6 = arith.constant 0 : index
    %c0_7 = arith.constant 0 : index
    %6 = memref.load %arg2[%c0_6, %c0_7] : memref<3x3xf32, #tpu.memory_space<smem>>
    %7 = vector.broadcast %6 : f32 to vector<8x128xf32>
    %8 = arith.mulf %7, %1 : vector<8x128xf32>
    %c0_8 = arith.constant 0 : index
    %c1_9 = arith.constant 1 : index
    %9 = memref.load %arg2[%c0_8, %c1_9] : memref<3x3xf32, #tpu.memory_space<smem>>
    %10 = vector.broadcast %9 : f32 to vector<8x128xf32>
    %11 = arith.mulf %10, %3 : vector<8x128xf32>
    %12 = arith.addf %8, %11 : vector<8x128xf32>
    %c0_10 = arith.constant 0 : index
    %c2_11 = arith.constant 2 : index
    %13 = memref.load %arg2[%c0_10, %c2_11] : memref<3x3xf32, #tpu.memory_space<smem>>
    %14 = vector.broadcast %13 : f32 to vector<8x128xf32>
    %15 = arith.mulf %14, %5 : vector<8x128xf32>
    %16 = arith.addf %12, %15 : vector<8x128xf32>
    %c0_12 = arith.constant 0 : index
    %17 = memref.load %arg3[%c0_12] : memref<3xf32, #tpu.memory_space<smem>>
    %18 = vector.broadcast %17 : f32 to vector<8x128xf32>
    %19 = arith.addf %16, %18 : vector<8x128xf32>
    %20 = arith.negf %19 : vector<8x128xf32>
    %21 = math.exp %20 : vector<8x128xf32>
    %cst = arith.constant 1.000000e+00 : f32
    %22 = vector.broadcast %cst : f32 to vector<8x128xf32>
    %23 = arith.addf %22, %21 : vector<8x128xf32>
    %24 = arith.divf %22, %23 : vector<8x128xf32>
    %c1_13 = arith.constant 1 : index
    %c0_14 = arith.constant 0 : index
    %25 = memref.load %arg2[%c1_13, %c0_14] : memref<3x3xf32, #tpu.memory_space<smem>>
    %26 = vector.broadcast %25 : f32 to vector<8x128xf32>
    %27 = arith.mulf %26, %1 : vector<8x128xf32>
    %c1_15 = arith.constant 1 : index
    %c1_16 = arith.constant 1 : index
    %28 = memref.load %arg2[%c1_15, %c1_16] : memref<3x3xf32, #tpu.memory_space<smem>>
    %29 = vector.broadcast %28 : f32 to vector<8x128xf32>
    %30 = arith.mulf %29, %3 : vector<8x128xf32>
    %31 = arith.addf %27, %30 : vector<8x128xf32>
    %c1_17 = arith.constant 1 : index
    %c2_18 = arith.constant 2 : index
    %32 = memref.load %arg2[%c1_17, %c2_18] : memref<3x3xf32, #tpu.memory_space<smem>>
    %33 = vector.broadcast %32 : f32 to vector<8x128xf32>
    %34 = arith.mulf %33, %5 : vector<8x128xf32>
    %35 = arith.addf %31, %34 : vector<8x128xf32>
    %c1_19 = arith.constant 1 : index
    %36 = memref.load %arg3[%c1_19] : memref<3xf32, #tpu.memory_space<smem>>
    %37 = vector.broadcast %36 : f32 to vector<8x128xf32>
    %38 = arith.addf %35, %37 : vector<8x128xf32>
    %39 = arith.negf %38 : vector<8x128xf32>
    %40 = math.exp %39 : vector<8x128xf32>
    %cst_20 = arith.constant 1.000000e+00 : f32
    %41 = vector.broadcast %cst_20 : f32 to vector<8x128xf32>
    %42 = arith.addf %41, %40 : vector<8x128xf32>
    %43 = arith.divf %41, %42 : vector<8x128xf32>
    %c2_21 = arith.constant 2 : index
    %c0_22 = arith.constant 0 : index
    %44 = memref.load %arg2[%c2_21, %c0_22] : memref<3x3xf32, #tpu.memory_space<smem>>
    %45 = vector.broadcast %44 : f32 to vector<8x128xf32>
    %46 = arith.mulf %45, %1 : vector<8x128xf32>
    %c2_23 = arith.constant 2 : index
    %c1_24 = arith.constant 1 : index
    %47 = memref.load %arg2[%c2_23, %c1_24] : memref<3x3xf32, #tpu.memory_space<smem>>
    %48 = vector.broadcast %47 : f32 to vector<8x128xf32>
    %49 = arith.mulf %48, %3 : vector<8x128xf32>
    %50 = arith.addf %46, %49 : vector<8x128xf32>
    %c2_25 = arith.constant 2 : index
    %c2_26 = arith.constant 2 : index
    %51 = memref.load %arg2[%c2_25, %c2_26] : memref<3x3xf32, #tpu.memory_space<smem>>
    %52 = vector.broadcast %51 : f32 to vector<8x128xf32>
    %53 = arith.mulf %52, %5 : vector<8x128xf32>
    %54 = arith.addf %50, %53 : vector<8x128xf32>
    %c2_27 = arith.constant 2 : index
    %55 = memref.load %arg3[%c2_27] : memref<3xf32, #tpu.memory_space<smem>>
    %56 = vector.broadcast %55 : f32 to vector<8x128xf32>
    %57 = arith.addf %54, %56 : vector<8x128xf32>
    %58 = arith.negf %57 : vector<8x128xf32>
    %59 = math.exp %58 : vector<8x128xf32>
    %cst_28 = arith.constant 1.000000e+00 : f32
    %60 = vector.broadcast %cst_28 : f32 to vector<8x128xf32>
    %61 = arith.addf %60, %59 : vector<8x128xf32>
    %62 = arith.divf %60, %61 : vector<8x128xf32>
    %c0_29 = arith.constant 0 : index
    %c0_30 = arith.constant 0 : index
    %63 = memref.load %arg4[%c0_29, %c0_30] : memref<2x3xf32, #tpu.memory_space<smem>>
    %64 = vector.broadcast %63 : f32 to vector<8x128xf32>
    %65 = arith.mulf %64, %24 : vector<8x128xf32>
    %c0_31 = arith.constant 0 : index
    %c1_32 = arith.constant 1 : index
    %66 = memref.load %arg4[%c0_31, %c1_32] : memref<2x3xf32, #tpu.memory_space<smem>>
    %67 = vector.broadcast %66 : f32 to vector<8x128xf32>
    %68 = arith.mulf %67, %43 : vector<8x128xf32>
    %69 = arith.addf %65, %68 : vector<8x128xf32>
    %c0_33 = arith.constant 0 : index
    %c2_34 = arith.constant 2 : index
    %70 = memref.load %arg4[%c0_33, %c2_34] : memref<2x3xf32, #tpu.memory_space<smem>>
    %71 = vector.broadcast %70 : f32 to vector<8x128xf32>
    %72 = arith.mulf %71, %62 : vector<8x128xf32>
    %73 = arith.addf %69, %72 : vector<8x128xf32>
    %c0_35 = arith.constant 0 : index
    %74 = memref.load %arg5[%c0_35] : memref<2xf32, #tpu.memory_space<smem>>
    %75 = vector.broadcast %74 : f32 to vector<8x128xf32>
    %76 = arith.addf %73, %75 : vector<8x128xf32>
    %cst_36 = arith.constant 0.000000e+00 : f32
    %77 = vector.broadcast %cst_36 : f32 to vector<8x128xf32>
    %78 = arith.maximumf %76, %77 : vector<8x128xf32>
    %c1_37 = arith.constant 1 : index
    %c0_38 = arith.constant 0 : index
    %79 = memref.load %arg4[%c1_37, %c0_38] : memref<2x3xf32, #tpu.memory_space<smem>>
    %80 = vector.broadcast %79 : f32 to vector<8x128xf32>
    %81 = arith.mulf %80, %24 : vector<8x128xf32>
    %c1_39 = arith.constant 1 : index
    %c1_40 = arith.constant 1 : index
    %82 = memref.load %arg4[%c1_39, %c1_40] : memref<2x3xf32, #tpu.memory_space<smem>>
    %83 = vector.broadcast %82 : f32 to vector<8x128xf32>
    %84 = arith.mulf %83, %43 : vector<8x128xf32>
    %85 = arith.addf %81, %84 : vector<8x128xf32>
    %c1_41 = arith.constant 1 : index
    %c2_42 = arith.constant 2 : index
    %86 = memref.load %arg4[%c1_41, %c2_42] : memref<2x3xf32, #tpu.memory_space<smem>>
    %87 = vector.broadcast %86 : f32 to vector<8x128xf32>
    %88 = arith.mulf %87, %62 : vector<8x128xf32>
    %89 = arith.addf %85, %88 : vector<8x128xf32>
    %c1_43 = arith.constant 1 : index
    %90 = memref.load %arg5[%c1_43] : memref<2xf32, #tpu.memory_space<smem>>
    %91 = vector.broadcast %90 : f32 to vector<8x128xf32>
    %92 = arith.addf %89, %91 : vector<8x128xf32>
    %cst_44 = arith.constant 0.000000e+00 : f32
    %93 = vector.broadcast %cst_44 : f32 to vector<8x128xf32>
    %94 = arith.maximumf %92, %93 : vector<8x128xf32>
    %c0_45 = arith.constant 0 : index
    %c0_46 = arith.constant 0 : index
    %95 = memref.load %arg6[%c0_45, %c0_46] : memref<2x2xf32, #tpu.memory_space<smem>>
    %96 = vector.broadcast %95 : f32 to vector<8x128xf32>
    %97 = arith.mulf %96, %78 : vector<8x128xf32>
    %c0_47 = arith.constant 0 : index
    %c1_48 = arith.constant 1 : index
    %98 = memref.load %arg6[%c0_47, %c1_48] : memref<2x2xf32, #tpu.memory_space<smem>>
    %99 = vector.broadcast %98 : f32 to vector<8x128xf32>
    %100 = arith.mulf %99, %94 : vector<8x128xf32>
    %101 = arith.addf %97, %100 : vector<8x128xf32>
    %c0_49 = arith.constant 0 : index
    %102 = memref.load %arg7[%c0_49] : memref<2xf32, #tpu.memory_space<smem>>
    %103 = vector.broadcast %102 : f32 to vector<8x128xf32>
    %104 = arith.addf %101, %103 : vector<8x128xf32>
    %c1_50 = arith.constant 1 : index
    %c0_51 = arith.constant 0 : index
    %105 = memref.load %arg6[%c1_50, %c0_51] : memref<2x2xf32, #tpu.memory_space<smem>>
    %106 = vector.broadcast %105 : f32 to vector<8x128xf32>
    %107 = arith.mulf %106, %78 : vector<8x128xf32>
    %c1_52 = arith.constant 1 : index
    %c1_53 = arith.constant 1 : index
    %108 = memref.load %arg6[%c1_52, %c1_53] : memref<2x2xf32, #tpu.memory_space<smem>>
    %109 = vector.broadcast %108 : f32 to vector<8x128xf32>
    %110 = arith.mulf %109, %94 : vector<8x128xf32>
    %111 = arith.addf %107, %110 : vector<8x128xf32>
    %c1_54 = arith.constant 1 : index
    %112 = memref.load %arg7[%c1_54] : memref<2xf32, #tpu.memory_space<smem>>
    %113 = vector.broadcast %112 : f32 to vector<8x128xf32>
    %114 = arith.addf %111, %113 : vector<8x128xf32>
    %115 = arith.subf %104, %114 : vector<8x128xf32>
    %116 = arith.negf %115 : vector<8x128xf32>
    %117 = math.exp %116 : vector<8x128xf32>
    %cst_55 = arith.constant 1.000000e+00 : f32
    %118 = vector.broadcast %cst_55 : f32 to vector<8x128xf32>
    %119 = arith.addf %118, %117 : vector<8x128xf32>
    %120 = arith.divf %118, %119 : vector<8x128xf32>
    %c0_56 = arith.constant 0 : index
    %c0_57 = arith.constant 0 : index
    %c0_58 = arith.constant 0 : index
    %121 = vector.load %arg8[%c0_56, %c0_57, %c0_58] : memref<2x8x128xf32, #tpu.memory_space<vmem>>, vector<1x8x128xf32>
    %122 = vector.shape_cast %121 : vector<1x8x128xf32> to vector<8x128xf32>
    %123 = vector.shape_cast %120 : vector<8x128xf32> to vector<1x8x128xf32>
    tpu.vector_store %arg8[%c0_56, %c0_57, %c0_58], %123 {strides = array<i32>} : memref<2x8x128xf32, #tpu.memory_space<vmem>>, vector<1x8x128xf32>,
    %cst_59 = arith.constant 1.000000e+00 : f32
    %124 = vector.broadcast %cst_59 : f32 to vector<8x128xf32>
    %125 = arith.subf %124, %120 : vector<8x128xf32>
    %c1_60 = arith.constant 1 : index
    %c0_61 = arith.constant 0 : index
    %c0_62 = arith.constant 0 : index
    %126 = vector.load %arg8[%c1_60, %c0_61, %c0_62] : memref<2x8x128xf32, #tpu.memory_space<vmem>>, vector<1x8x128xf32>
    %127 = vector.shape_cast %126 : vector<1x8x128xf32> to vector<8x128xf32>
    %128 = vector.shape_cast %125 : vector<8x128xf32> to vector<1x8x128xf32>
    tpu.vector_store %arg8[%c1_60, %c0_61, %c0_62], %128 {strides = array<i32>} : memref<2x8x128xf32, #tpu.memory_space<vmem>>, vector<1x8x128xf32>,
    return
  }
  func.func @transform_0(%arg0: i32) -> (i32, i32, i32) {
    %c0_i32 = arith.constant 0 : i32
    %c0_i32_0 = arith.constant 0 : i32
    %c0_i32_1 = arith.constant 0 : i32
    return %c0_i32, %arg0, %c0_i32_0 : i32, i32, i32
  }
  func.func @transform_1(%arg0: i32) -> (i32, i32) {
    %c0_i32 = arith.constant 0 : i32
    %c0_i32_0 = arith.constant 0 : i32
    %c0_i32_1 = arith.constant 0 : i32
    return %c0_i32, %c0_i32_0 : i32, i32
  }
  func.func @transform_2(%arg0: i32) -> i32 {
    %c0_i32 = arith.constant 0 : i32
    %c0_i32_0 = arith.constant 0 : i32
    return %c0_i32 : i32
  }
  func.func @transform_3(%arg0: i32) -> (i32, i32) {
    %c0_i32 = arith.constant 0 : i32
    %c0_i32_0 = arith.constant 0 : i32
    %c0_i32_1 = arith.constant 0 : i32
    return %c0_i32, %c0_i32_0 : i32, i32
  }
  func.func @transform_4(%arg0: i32) -> i32 {
    %c0_i32 = arith.constant 0 : i32
    %c0_i32_0 = arith.constant 0 : i32
    return %c0_i32 : i32
  }
  func.func @transform_5(%arg0: i32) -> (i32, i32) {
    %c0_i32 = arith.constant 0 : i32
    %c0_i32_0 = arith.constant 0 : i32
    %c0_i32_1 = arith.constant 0 : i32
    return %c0_i32, %c0_i32_0 : i32, i32
  }
  func.func @transform_6(%arg0: i32) -> i32 {
    %c0_i32 = arith.constant 0 : i32
    %c0_i32_0 = arith.constant 0 : i32
    return %c0_i32 : i32
  }
  func.func @transform_7(%arg0: i32) -> (i32, i32, i32) {
    %c0_i32 = arith.constant 0 : i32
    %c0_i32_0 = arith.constant 0 : i32
    %c0_i32_1 = arith.constant 0 : i32
    return %c0_i32, %arg0, %c0_i32_0 : i32, i32, i32
  }
}

</mosaic_0001>

<llo_original>
// kernel: model_demo_forward.1
$region0: #{model_demo_forward.1}
  #allocation0 [shape = 'u32[]', space=smem, size = 0x4, offset = 0x4, fixed_abs, tag = 'smem constant byte address 0x4 - core index']
  #allocation1 [shape = 'u32[144,128]{1,0:T(1,128)}', space=vmem, size = 0x12000, scoped, tag = 'internal scratch']
  %s0 = inlined_call_operand.vmem [shape: f32[3,16,128], index: 0, kind: input, shape index: {}]
  %s1 = inlined_call_operand.vmem [shape: f32[3,3], index: 1, kind: input, shape index: {}]
  %s2 = inlined_call_operand.vmem [shape: f32[3], index: 2, kind: input, shape index: {}]
  %s3 = inlined_call_operand.vmem [shape: f32[2,3], index: 3, kind: input, shape index: {}]
  %s4 = inlined_call_operand.vmem [shape: f32[2], index: 4, kind: input, shape index: {}]
  %s5 = inlined_call_operand.vmem [shape: f32[2,2], index: 5, kind: input, shape index: {}]
  %s6 = inlined_call_operand.vmem [shape: f32[2], index: 6, kind: input, shape index: {}]
  %s7 = inlined_call_operand.vmem [shape: f32[2,16,128], index: 7, kind: output, shape index: {}]
  %s8 = sld [smem:[#allocation0]]
  $region157: #{model_demo_forward.1} parent=0
    _
  %s10 = ssub.s32 1, %s8
  %s11 = scalar_select 0, %s10, %s8
  $region1: #{model_demo_forward.1} parent=0
    #allocation2 [shape = 'u8[24576]{0}', space=vmem, size = 0x6000, scoped, tag = 'input window, operand 0']
    #allocation3 [shape = 'u8[2048]{0}', space=smem, size = 0x800, scoped, tag = 'input window, operand 1, single buffered']
    #allocation4 [shape = 's32[2]{0}', space=sflag, size = 0x8, scoped, tag = 'scoped memory for model_demo_forward.1']
    #allocation5 [shape = 'u8[512]{0}', space=smem, size = 0x200, scoped, tag = 'input window, operand 2, single buffered']
    #allocation6 [shape = 's32[1]{0}', space=sflag, size = 0x4, scoped, tag = 'scoped memory for model_demo_forward.1']
    #allocation7 [shape = 'u8[1024]{0}', space=smem, size = 0x400, scoped, tag = 'input window, operand 3, single buffered']
    #allocation8 [shape = 'u8[512]{0}', space=smem, size = 0x200, scoped, tag = 'input window, operand 4, single buffered']
    #allocation9 [shape = 's32[1]{0}', space=sflag, size = 0x4, scoped, tag = 'scoped memory for model_demo_forward.1']
    #allocation10 [shape = 'u8[1024]{0}', space=smem, size = 0x400, scoped, tag = 'input window, operand 5, single buffered']
    #allocation11 [shape = 'u8[512]{0}', space=smem, size = 0x200, scoped, tag = 'input window, operand 6, single buffered']
    #allocation12 [shape = 's32[1]{0}', space=sflag, size = 0x4, scoped, tag = 'scoped memory for model_demo_forward.1']
    #allocation13 [shape = 'u8[16384]{0}', space=vmem, size = 0x4000, scoped, tag = 'output window, operand 0']
    %12 = vsyncpa [#allocation4], 0
    %13 = vsyncpa [#allocation6], 0
    %14 = vsyncpa [#allocation9], 0
    %15 = vsyncpa [#allocation12], 0
    loop: start=0, step=1, limit=4
    $region2: #{model_demo_forward.1} parent=1 // loop_pre_header
      _
    $region3: #{model_demo_forward.1} parent=1 // loop_header
      %s17 = sphi 0, %s21
      %p18 = scmp.ge.s32.totalorder %s17, 4
      %s27 = sphi 0, %s29
      %s30 = sphi 0, %s27
      %s31 = sphi 0, %s30
      %s47 = sphi 0, %s31
      %s51 = sphi 0, %s51
      %s53 = sphi 0, %s51
      %s54 = sphi 0, %s53
      %s68 = sphi 0, %s54
      %s72 = sphi 0, %s72
      %s74 = sphi 0, %s72
      %s75 = sphi 0, %s74
      %s89 = sphi 0, %s75
      %s93 = sphi 0, %s93
      %s95 = sphi 0, %s93
      %s96 = sphi 0, %s95
      %s110 = sphi 0, %s96
      %s114 = sphi 0, %s114
      %s116 = sphi 0, %s114
      %s117 = sphi 0, %s116
      %s131 = sphi 0, %s117
      %s135 = sphi 0, %s135
      %s137 = sphi 0, %s135
      %s138 = sphi 0, %s137
      %s152 = sphi 0, %s138
      %s156 = sphi 0, %s156
      %s158 = sphi 0, %s156
      %s159 = sphi 0, %s158
      %s173 = sphi 0, %s159
      %s179 = sphi 0, %s181
      %s182 = sphi 0, %s179
      %s183 = sphi 0, %s182
      %s199 = sphi 0, %s183
    $region4: #{model_demo_forward.1} parent=1 // loop_header_branch
      %20 = sbr.rel (%p18) target = $region8
    $region5: #{model_demo_forward.1} parent=1 // loop_body
      %s22 = ssub.s32 %s17, 1
      %s23 = ssub.s32 %s17, 2
      %s24 = sadd.s32 %s17, 1
      %s25 = ssub.s32 %s17, %s24
      %p26 = scmp.eq.s32.totalorder %s25, 0
      %s28 = sadd.s32 %s27, 1
      %s29 = scalar_select %p26, %s27, %s28
      %p32 = pneg %p26
      %p33 = scmp.eq.s32.totalorder %s17, 1
      %p34 = por %p32, %p33
      %p35 = scmp.ne.s32.totalorder %s27, %s30
      %p36 = scmp.eq.s32.totalorder %s17, 0
      %p37 = por %p35, %p36
      %p38 = scmp.ne.s32.totalorder %s27, %s30
      %p39 = scmp.eq.s32.totalorder %s22, 1
      %p40 = por %p38, %p39
      %p41 = scmp.ne.s32.totalorder %s30, %s31
      %p42 = scmp.eq.s32.totalorder %s22, 0
      %p43 = por %p41, %p42
      %p44 = scmp.ne.s32.totalorder %s30, %s31
      %p45 = scmp.eq.s32.totalorder %s23, 1
      %p46 = por %p44, %p45
      %p48 = scmp.ne.s32.totalorder %s31, %s47
      %p49 = scmp.eq.s32.totalorder %s23, 0
      %p50 = por %p48, %p49
      %s52 = sadd.s32 %s51, 1
      %p55 = scmp.eq.s32.totalorder %s17, 1
      %p56 = scmp.ne.s32.totalorder %s51, %s53
      %p57 = scmp.eq.s32.totalorder %s17, 0
      %p58 = por %p56, %p57
      %p59 = scmp.ne.s32.totalorder %s51, %s53
      %p60 = scmp.eq.s32.totalorder %s22, 1
      %p61 = por %p59, %p60
      %p62 = scmp.ne.s32.totalorder %s53, %s54
      %p63 = scmp.eq.s32.totalorder %s22, 0
      %p64 = por %p62, %p63
      %p65 = scmp.ne.s32.totalorder %s53, %s54
      %p66 = scmp.eq.s32.totalorder %s23, 1
      %p67 = por %p65, %p66
      %p69 = scmp.ne.s32.totalorder %s54, %s68
      %p70 = scmp.eq.s32.totalorder %s23, 0
      %p71 = por %p69, %p70
      %s73 = sadd.s32 %s72, 1
      %p76 = scmp.eq.s32.totalorder %s17, 1
      %p77 = scmp.ne.s32.totalorder %s72, %s74
      %p78 = scmp.eq.s32.totalorder %s17, 0
      %p79 = por %p77, %p78
      %p80 = scmp.ne.s32.totalorder %s72, %s74
      %p81 = scmp.eq.s32.totalorder %s22, 1
      %p82 = por %p80, %p81
      %p83 = scmp.ne.s32.totalorder %s74, %s75
      %p84 = scmp.eq.s32.totalorder %s22, 0
      %p85 = por %p83, %p84
      %p86 = scmp.ne.s32.totalorder %s74, %s75
      %p87 = scmp.eq.s32.totalorder %s23, 1
      %p88 = por %p86, %p87
      %p90 = scmp.ne.s32.totalorder %s75, %s89
      %p91 = scmp.eq.s32.totalorder %s23, 0
      %p92 = por %p90, %p91
      %s94 = sadd.s32 %s93, 1
      %p97 = scmp.eq.s32.totalorder %s17, 1
      %p98 = scmp.ne.s32.totalorder %s93, %s95
      %p99 = scmp.eq.s32.totalorder %s17, 0
      %p100 = por %p98, %p99
      %p101 = scmp.ne.s32.totalorder %s93, %s95
      %p102 = scmp.eq.s32.totalorder %s22, 1
      %p103 = por %p101, %p102
      %p104 = scmp.ne.s32.totalorder %s95, %s96
      %p105 = scmp.eq.s32.totalorder %s22, 0
      %p106 = por %p104, %p105
      %p107 = scmp.ne.s32.totalorder %s95, %s96
      %p108 = scmp.eq.s32.totalorder %s23, 1
      %p109 = por %p107, %p108
      %p111 = scmp.ne.s32.totalorder %s96, %s110
      %p112 = scmp.eq.s32.totalorder %s23, 0
      %p113 = por %p111, %p112
      %s115 = sadd.s32 %s114, 1
      %p118 = scmp.eq.s32.totalorder %s17, 1
      %p119 = scmp.ne.s32.totalorder %s114, %s116
      %p120 = scmp.eq.s32.totalorder %s17, 0
      %p121 = por %p119, %p120
      %p122 = scmp.ne.s32.totalorder %s114, %s116
      %p123 = scmp.eq.s32.totalorder %s22, 1
      %p124 = por %p122, %p123
      %p125 = scmp.ne.s32.totalorder %s116, %s117
      %p126 = scmp.eq.s32.totalorder %s22, 0
      %p127 = por %p125, %p126
      %p128 = scmp.ne.s32.totalorder %s116, %s117
      %p129 = scmp.eq.s32.totalorder %s23, 1
      %p130 = por %p128, %p129
      %p132 = scmp.ne.s32.totalorder %s117, %s131
      %p133 = scmp.eq.s32.totalorder %s23, 0
      %p134 = por %p132, %p133
      %s136 = sadd.s32 %s135, 1
      %p139 = scmp.eq.s32.totalorder %s17, 1
      %p140 = scmp.ne.s32.totalorder %s135, %s137
      %p141 = scmp.eq.s32.totalorder %s17, 0
      %p142 = por %p140, %p141
      %p143 = scmp.ne.s32.totalorder %s135, %s137
      %p144 = scmp.eq.s32.totalorder %s22, 1
      %p145 = por %p143, %p144
      %p146 = scmp.ne.s32.totalorder %s137, %s138
      %p147 = scmp.eq.s32.totalorder %s22, 0
      %p148 = por %p146, %p147
      %p149 = scmp.ne.s32.totalorder %s137, %s138
      %p150 = scmp.eq.s32.totalorder %s23, 1
      %p151 = por %p149, %p150
      %p153 = scmp.ne.s32.totalorder %s138, %s152
      %p154 = scmp.eq.s32.totalorder %s23, 0
      %p155 = por %p153, %p154
      %s157 = sadd.s32 %s156, 1
      %p160 = scmp.eq.s32.totalorder %s17, 1
      %p161 = scmp.ne.s32.totalorder %s156, %s158
      %p162 = scmp.eq.s32.totalorder %s17, 0
      %p163 = por %p161, %p162
      %p164 = scmp.ne.s32.totalorder %s156, %s158
      %p165 = scmp.eq.s32.totalorder %s22, 1
      %p166 = por %p164, %p165
      %p167 = scmp.ne.s32.totalorder %s158, %s159
      %p168 = scmp.eq.s32.totalorder %s22, 0
      %p169 = por %p167, %p168
      %p170 = scmp.ne.s32.totalorder %s158, %s159
      %p171 = scmp.eq.s32.totalorder %s23, 1
      %p172 = por %p170, %p171
      %p174 = scmp.ne.s32.totalorder %s159, %s173
      %p175 = scmp.eq.s32.totalorder %s23, 0
      %p176 = por %p174, %p175
      %s177 = ssub.s32 %s17, %s24
      %p178 = scmp.eq.s32.totalorder %s177, 0
      %s180 = sadd.s32 %s179, 1
      %s181 = scalar_select %p178, %s179, %s180
      %p184 = pneg %p178
      %p185 = scmp.eq.s32.totalorder %s17, 1
      %p186 = por %p184, %p185
      %p187 = scmp.ne.s32.totalorder %s179, %s182
      %p188 = scmp.eq.s32.totalorder %s17, 0
      %p189 = por %p187, %p188
      %p190 = scmp.ne.s32.totalorder %s179, %s182
      %p191 = scmp.eq.s32.totalorder %s22, 1
      %p192 = por %p190, %p191
      %p193 = scmp.ne.s32.totalorder %s182, %s183
      %p194 = scmp.eq.s32.totalorder %s22, 0
      %p195 = por %p193, %p194
      %p196 = scmp.ne.s32.totalorder %s182, %s183
      %p197 = scmp.eq.s32.totalorder %s23, 1
      %p198 = por %p196, %p197
      %p200 = scmp.ne.s32.totalorder %s183, %s199
      %p201 = scmp.eq.s32.totalorder %s23, 0
      %p202 = por %p200, %p201
      %p203 = scmp.le.s32.totalorder 1, %s17
      %p204 = scmp.lt.s32.totalorder %s17, 3
      %p205 = pnand %p203, %p204
      %p206 = pneg %p205
      // Predicated region
      $region9: #{model_demo_forward.1} parent=5 // pred_check
        _
      $region10: #{model_demo_forward.1} parent=5 // pred_check_branch
        %208 = sbr.rel (%p205) target = $region12
      $region11: #{model_demo_forward.1} parent=5 // pred_region
        %s209 = ssub.s32 %s17, 1
        // Predicated region
        $region13: #{model_demo_forward.1} parent=11 // pred_check
          %p210 = pneg %p64
        $region14: #{model_demo_forward.1} parent=11 // pred_check_branch
          %212 = sbr.rel (%p210) target = $region16
        $region15: #{model_demo_forward.1} parent=11 // pred_region
          %s214 = ssub.s32 64, 64
          %215 = vsyncadd [#allocation4], %s214
          %s217 = sshll.u32 %s1, 4
          %s218 = int_to_ptr.vmem [resolvable:$true] %s217
          %220 = dma.vmem_to_smem %s218, 64, [#allocation3], [#allocation4]
        $region16: #{model_demo_forward.1} parent=11 // pred_fallthru
          _
        // Predicated region
        $region17: #{model_demo_forward.1} parent=11 // pred_check
          %p221 = pneg %p85
        $region18: #{model_demo_forward.1} parent=11 // pred_check_branch
          %223 = sbr.rel (%p221) target = $region20
        $region19: #{model_demo_forward.1} parent=11 // pred_region
          %s225 = ssub.s32 16, 16
          %226 = vsyncadd [#allocation6], %s225
          %s228 = sshll.u32 %s2, 4
          %s229 = int_to_ptr.vmem [resolvable:$true] %s228
          %231 = dma.vmem_to_smem %s229, 16, [#allocation5], [#allocation6]
        $region20: #{model_demo_forward.1} parent=11 // pred_fallthru
          _
        // Predicated region
        $region21: #{model_demo_forward.1} parent=11 // pred_check
          %p232 = pneg %p106
        $region22: #{model_demo_forward.1} parent=11 // pred_check_branch
          %234 = sbr.rel (%p232) target = $region24
        $region23: #{model_demo_forward.1} parent=11 // pred_region
          %s236 = ssub.s32 32, 32
          %237 = vsyncadd [#allocation6], %s236
          %s239 = sshll.u32 %s3, 4
          %s240 = int_to_ptr.vmem [resolvable:$true] %s239
          %242 = dma.vmem_to_smem %s240, 32, [#allocation7], [#allocation6]
        $region24: #{model_demo_forward.1} parent=11 // pred_fallthru
          _
        // Predicated region
        $region25: #{model_demo_forward.1} parent=11 // pred_check
          %p243 = pneg %p127
        $region26: #{model_demo_forward.1} parent=11 // pred_check_branch
          %245 = sbr.rel (%p243) target = $region28
        $region27: #{model_demo_forward.1} parent=11 // pred_region
          %s247 = ssub.s32 16, 16
          %248 = vsyncadd [#allocation9], %s247
          %s250 = sshll.u32 %s4, 4
          %s251 = int_to_ptr.vmem [resolvable:$true] %s250
          %253 = dma.vmem_to_smem %s251, 16, [#allocation8], [#allocation9]
        $region28: #{model_demo_forward.1} parent=11 // pred_fallthru
          _
        // Predicated region
        $region29: #{model_demo_forward.1} parent=11 // pred_check
          %p254 = pneg %p148
        $region30: #{model_demo_forward.1} parent=11 // pred_check_branch
          %256 = sbr.rel (%p254) target = $region32
        $region31: #{model_demo_forward.1} parent=11 // pred_region
          %s258 = ssub.s32 32, 32
          %259 = vsyncadd [#allocation9], %s258
          %s261 = sshll.u32 %s5, 4
          %s262 = int_to_ptr.vmem [resolvable:$true] %s261
          %264 = dma.vmem_to_smem %s262, 32, [#allocation10], [#allocation9]
        $region32: #{model_demo_forward.1} parent=11 // pred_fallthru
          _
        // Predicated region
        $region33: #{model_demo_forward.1} parent=11 // pred_check
          %p265 = pneg %p169
        $region34: #{model_demo_forward.1} parent=11 // pred_check_branch
          %267 = sbr.rel (%p265) target = $region36
        $region35: #{model_demo_forward.1} parent=11 // pred_region
          %s269 = ssub.s32 16, 16
          %270 = vsyncadd [#allocation12], %s269
          %s272 = sshll.u32 %s6, 4
          %s273 = int_to_ptr.vmem [resolvable:$true] %s272
          %275 = dma.vmem_to_smem %s273, 16, [#allocation11], [#allocation12]
        $region36: #{model_demo_forward.1} parent=11 // pred_fallthru
          _
      $region12: #{model_demo_forward.1} parent=5 // pred_fallthru
        _
      %p276 = scmp.lt.s32.totalorder %s17, 2
      // Predicated region
      $region37: #{model_demo_forward.1} parent=5 // pred_check
        %p277 = pneg %p276
      $region38: #{model_demo_forward.1} parent=5 // pred_check_branch
        %279 = sbr.rel (%p277) target = $region40
      $region39: #{model_demo_forward.1} parent=5 // pred_region
        // Predicated region
        $region41: #{model_demo_forward.1} parent=39 // pred_check
          %p280 = pneg %p37
        $region42: #{model_demo_forward.1} parent=39 // pred_check_branch
          %282 = sbr.rel (%p280) target = $region44
        $region43: #{model_demo_forward.1} parent=39 // pred_region
          %s283 = sand.u32 %s27, 1
          %s284 = sand.u32 %s27, 1
          %s285 = smul.addr %s284, 24
          %s286 = scalar_lea.vmem [#allocation2], %s285
          %s287 = smul.addr %s17, 8
          %s288 = scalar_lea.vmem %s0, %s287
          // Predicated region
          $region45: #{model_demo_forward.1} parent=43 // pred_check
            _
          $region46: #{model_demo_forward.1} parent=43 // pred_check_branch
            %290 = sbr.rel (0) target = $region48
          $region47: #{model_demo_forward.1} parent=43 // pred_region
            // Predicated region
            $region49: #{model_demo_forward.1} parent=47 // pred_check
              _
            $region50: #{model_demo_forward.1} parent=47 // pred_check_branch
              %292 = sbr.rel (0) target = $region52
            $region51: #{model_demo_forward.1} parent=47 // pred_region
              // Predicated region
              $region64: #{model_demo_forward.1} parent=51 // pred_check
                _
              $region65: #{model_demo_forward.1} parent=51 // pred_check_branch
                %311 = sbr.rel (0) target = $region67
              $region66: #{model_demo_forward.1} parent=51 // pred_region
                loop: start=0, step=1, limit=1
                $region68: #{model_demo_forward.1} parent=66 // loop_pre_header
                  _
                $region69: #{model_demo_forward.1} parent=66 // loop_header
                  %s313 = sphi 0, %s317
                  %p314 = scmp.ge.s32.totalorder %s313, 1
                  %s318 = sphi %s288, %s288
                  %s319 = sphi %s286, %s286
                $region70: #{model_demo_forward.1} parent=66 // loop_header_branch
                  %316 = sbr.rel (%p314) target = $region74
                $region71: #{model_demo_forward.1} parent=66 // loop_body
                  %v320 = vld [vmem:[%s318] sm:$0xff]
                  %321 = vst [vmem:[%s319] sm:$0xff] %v320
                  %v322 = vld [vmem:[%s318 + $0x10] sm:$0xff]
                  %323 = vst [vmem:[%s319 + $0x8] sm:$0xff] %v322
                  %v324 = vld [vmem:[%s318 + $0x20] sm:$0xff]
                  %325 = vst [vmem:[%s319 + $0x10] sm:$0xff] %v324
                $region72: #{model_demo_forward.1} parent=66 // loop_footer
                  %s317 = sadd.s32 1, %s313
                $region73: #{model_demo_forward.1} parent=66 // loop_footer_branch
                  %312 = sbr.rel target = $region69
                $region74: #{model_demo_forward.1} parent=66 // loop_exit
                  _
              $region67: #{model_demo_forward.1} parent=51 // pred_fallthru
                _
              // Predicated region
              $region75: #{model_demo_forward.1} parent=51 // pred_check
                _
              $region76: #{model_demo_forward.1} parent=51 // pred_check_branch
                %327 = sbr.rel target = $region78
              $region77: #{model_demo_forward.1} parent=51 // pred_region
                _
              $region78: #{model_demo_forward.1} parent=51 // pred_fallthru
                _
            $region52: #{model_demo_forward.1} parent=47 // pred_fallthru
              _
            // Predicated region
            $region53: #{model_demo_forward.1} parent=47 // pred_check
              _
            $region54: #{model_demo_forward.1} parent=47 // pred_check_branch
              %294 = sbr.rel target = $region56
            $region55: #{model_demo_forward.1} parent=47 // pred_region
              loop: start=0, step=1, limit=1
              $region57: #{model_demo_forward.1} parent=55 // loop_pre_header
                _
              $region58: #{model_demo_forward.1} parent=55 // loop_header
                %s297 = sphi 0, %s301
                %p298 = scmp.ge.s32.totalorder %s297, 1
                %s302 = sphi %s288, %s288
                %s303 = sphi %s286, %s286
              $region59: #{model_demo_forward.1} parent=55 // loop_header_branch
                %300 = sbr.rel (%p298) target = $region63
              $region60: #{model_demo_forward.1} parent=55 // loop_body
                %v304 = vld [vmem:[%s302] sm:$0xff]
                %305 = vst [vmem:[%s303] sm:$0xff] %v304
                %v306 = vld [vmem:[%s302 + $0x10] sm:$0xff]
                %307 = vst [vmem:[%s303 + $0x8] sm:$0xff] %v306
                %v308 = vld [vmem:[%s302 + $0x20] sm:$0xff]
                %309 = vst [vmem:[%s303 + $0x10] sm:$0xff] %v308
              $region61: #{model_demo_forward.1} parent=55 // loop_footer
                %s301 = sadd.s32 1, %s297
              $region62: #{model_demo_forward.1} parent=55 // loop_footer_branch
                %296 = sbr.rel target = $region58
              $region63: #{model_demo_forward.1} parent=55 // loop_exit
                _
            $region56: #{model_demo_forward.1} parent=47 // pred_fallthru
              _
          $region48: #{model_demo_forward.1} parent=43 // pred_fallthru
            _
          %328 = vnop
        $region44: #{model_demo_forward.1} parent=39 // pred_fallthru
          _
      $region40: #{model_demo_forward.1} parent=5 // pred_fallthru
        _
      %p329 = scmp.le.s32.totalorder 1, %s17
      %p330 = scmp.lt.s32.totalorder %s17, 3
      %p331 = pnand %p329, %p330
      %p332 = pneg %p331
      // Predicated region
      $region79: #{model_demo_forward.1} parent=5 // pred_check
        _
      $region80: #{model_demo_forward.1} parent=5 // pred_check_branch
        %334 = sbr.rel (%p331) target = $region82
      $region81: #{model_demo_forward.1} parent=5 // pred_region
        %s335 = ssub.s32 %s17, 1
        %s336 = sand.u32 %s30, 1
        %s337 = sand.u32 %s30, 1
        %s338 = smul.addr %s337, 24
        %s339 = scalar_lea.vmem [#allocation2], %s338
        // Predicated region
        $region83: #{model_demo_forward.1} parent=81 // pred_check
          %p340 = pneg %p43
        $region84: #{model_demo_forward.1} parent=81 // pred_check_branch
          %342 = sbr.rel (%p340) target = $region86
        $region85: #{model_demo_forward.1} parent=81 // pred_region
          _
        $region86: #{model_demo_forward.1} parent=81 // pred_fallthru
          _
        // Predicated region
        $region87: #{model_demo_forward.1} parent=81 // pred_check
          %p343 = pneg %p64
        $region88: #{model_demo_forward.1} parent=81 // pred_check_branch
          %345 = sbr.rel (%p343) target = $region90
        $region89: #{model_demo_forward.1} parent=81 // pred_region
          %346 = dma.done [#allocation4], 64
        $region90: #{model_demo_forward.1} parent=81 // pred_fallthru
          _
        // Predicated region
        $region91: #{model_demo_forward.1} parent=81 // pred_check
          %p347 = pneg %p85
        $region92: #{model_demo_forward.1} parent=81 // pred_check_branch
          %349 = sbr.rel (%p347) target = $region94
        $region93: #{model_demo_forward.1} parent=81 // pred_region
          %350 = dma.done [#allocation6], 16
        $region94: #{model_demo_forward.1} parent=81 // pred_fallthru
          _
        // Predicated region
        $region95: #{model_demo_forward.1} parent=81 // pred_check
          %p351 = pneg %p106
        $region96: #{model_demo_forward.1} parent=81 // pred_check_branch
          %353 = sbr.rel (%p351) target = $region98
        $region97: #{model_demo_forward.1} parent=81 // pred_region
          %354 = dma.done [#allocation6], 32
        $region98: #{model_demo_forward.1} parent=81 // pred_fallthru
          _
        // Predicated region
        $region99: #{model_demo_forward.1} parent=81 // pred_check
          %p355 = pneg %p127
        $region100: #{model_demo_forward.1} parent=81 // pred_check_branch
          %357 = sbr.rel (%p355) target = $region102
        $region101: #{model_demo_forward.1} parent=81 // pred_region
          %358 = dma.done [#allocation9], 16
        $region102: #{model_demo_forward.1} parent=81 // pred_fallthru
          _
        // Predicated region
        $region103: #{model_demo_forward.1} parent=81 // pred_check
          %p359 = pneg %p148
        $region104: #{model_demo_forward.1} parent=81 // pred_check_branch
          %361 = sbr.rel (%p359) target = $region106
        $region105: #{model_demo_forward.1} parent=81 // pred_region
          %362 = dma.done [#allocation9], 32
        $region106: #{model_demo_forward.1} parent=81 // pred_fallthru
          _
        // Predicated region
        $region107: #{model_demo_forward.1} parent=81 // pred_check
          %p363 = pneg %p169
        $region108: #{model_demo_forward.1} parent=81 // pred_check_branch
          %365 = sbr.rel (%p363) target = $region110
        $region109: #{model_demo_forward.1} parent=81 // pred_region
          %366 = dma.done [#allocation12], 16
        $region110: #{model_demo_forward.1} parent=81 // pred_fallthru
          _
        %367 = sfence
        %s368 = sand.u32 %s30, 1
        %s369 = sand.u32 %s30, 1
        %s370 = smul.addr %s369, 24
        %s371 = scalar_lea.vmem [#allocation2], %s370
        %p372 = pneg %p43
        %p373 = pneg %p40
        %p374 = pneg %p64
        %p375 = pneg %p61
        %p376 = pneg %p85
        %p377 = pneg %p82
        %p378 = pneg %p106
        %p379 = pneg %p103
        %p380 = pneg %p127
        %p381 = pneg %p124
        %p382 = pneg %p148
        %p383 = pneg %p145
        %p384 = pneg %p169
        %p385 = pneg %p166
        %p386 = pneg %p195
        %p387 = pneg %p192
        %s388 = sand.u32 %s182, 1
        %s389 = sand.u32 %s182, 1
        %s390 = smul.addr %s389, 16
        %s391 = scalar_lea.vmem [#allocation13], %s390
        %v392 = vld [vmem:[%s339] sm:$0xff]
        %s393 = scalar_lea.vmem %s339, 8 [#allocation2]
        %v394 = vld [vmem:[%s393] sm:$0xff]
        %s395 = scalar_lea.vmem %s339, 16 [#allocation2]
        %v396 = vld [vmem:[%s395] sm:$0xff]
        %s397 = sld [smem:[#allocation3]]
        %v398 = vstv %s397
        %v399 = vmul.f32 %v398, %v392
        %s400 = sld [smem:[#allocation3 + $0x1]]
        %v401 = vstv %s400
        %v402 = vmul.f32 %v401, %v394
        %v403 = vadd.f32 %v399, %v402
        %s404 = sld [smem:[#allocation3 + $0x2]]
        %v405 = vstv %s404
        %v406 = vmul.f32 %v405, %v396
        %v407 = vadd.f32 %v403, %v406
        %s408 = sld [smem:[#allocation5]]
        %v409 = vstv %s408
        %v410 = vadd.f32 %v407, %v409
        %v411 = vxor.u32 %v410, 2147483648
        %v412 = vmul.f32 %v411, 1.442695
        %v413 = vpow.pop %v412
        %v414 = vadd.f32 %v413, 1.0
        %v415 = vrcp.pop %v414
        %v416 = vmul.f32 1.0, %v415
        %s417 = sld [smem:[#allocation3 + $0x80]]
        %v418 = vstv %s417
        %v419 = vmul.f32 %v418, %v392
        %s420 = sld [smem:[#allocation3 + $0x81]]
        %v421 = vstv %s420
        %v422 = vmul.f32 %v421, %v394
        %v423 = vadd.f32 %v419, %v422
        %s424 = sld [smem:[#allocation3 + $0x82]]
        %v425 = vstv %s424
        %v426 = vmul.f32 %v425, %v396
        %v427 = vadd.f32 %v423, %v426
        %s428 = sld [smem:[#allocation5 + $0x1]]
        %v429 = vstv %s428
        %v430 = vadd.f32 %v427, %v429
        %v431 = vxor.u32 %v430, 2147483648
        %v432 = vmul.f32 %v431, 1.442695
        %v433 = vpow.pop %v432
        %v434 = vadd.f32 %v433, 1.0
        %v435 = vrcp.pop %v434
        %v436 = vmul.f32 1.0, %v435
        %s437 = sld [smem:[#allocation3 + $0x100]]
        %v438 = vstv %s437
        %v439 = vmul.f32 %v438, %v392
        %s440 = sld [smem:[#allocation3 + $0x101]]
        %v441 = vstv %s440
        %v442 = vmul.f32 %v441, %v394
        %v443 = vadd.f32 %v439, %v442
        %s444 = sld [smem:[#allocation3 + $0x102]]
        %v445 = vstv %s444
        %v446 = vmul.f32 %v445, %v396
        %v447 = vadd.f32 %v443, %v446
        %s448 = sld [smem:[#allocation5 + $0x2]]
        %v449 = vstv %s448
        %v450 = vadd.f32 %v447, %v449
        %v451 = vxor.u32 %v450, 2147483648
        %v452 = vmul.f32 %v451, 1.442695
        %v453 = vpow.pop %v452
        %v454 = vadd.f32 %v453, 1.0
        %v455 = vrcp.pop %v454
        %v456 = vmul.f32 1.0, %v455
        %s457 = sld [smem:[#allocation7]]
        %v458 = vstv %s457
        %v459 = vmul.f32 %v458, %v416
        %s460 = sld [smem:[#allocation7 + $0x1]]
        %v461 = vstv %s460
        %v462 = vmul.f32 %v461, %v436
        %v463 = vadd.f32 %v459, %v462
        %s464 = sld [smem:[#allocation7 + $0x2]]
        %v465 = vstv %s464
        %v466 = vmul.f32 %v465, %v456
        %v467 = vadd.f32 %v463, %v466
        %s468 = sld [smem:[#allocation8]]
        %v469 = vstv %s468
        %v470 = vadd.f32 %v467, %v469
        %v471 = vmax.f32 %v470, 0.0
        %s472 = sld [smem:[#allocation7 + $0x80]]
        %v473 = vstv %s472
        %v474 = vmul.f32 %v473, %v416
        %s475 = sld [smem:[#allocation7 + $0x81]]
        %v476 = vstv %s475
        %v477 = vmul.f32 %v476, %v436
        %v478 = vadd.f32 %v474, %v477
        %s479 = sld [smem:[#allocation7 + $0x82]]
        %v480 = vstv %s479
        %v481 = vmul.f32 %v480, %v456
        %v482 = vadd.f32 %v478, %v481
        %s483 = sld [smem:[#allocation8 + $0x1]]
        %v484 = vstv %s483
        %v485 = vadd.f32 %v482, %v484
        %v486 = vmax.f32 %v485, 0.0
        %s487 = sld [smem:[#allocation10]]
        %v488 = vstv %s487
        %v489 = vmul.f32 %v488, %v471
        %s490 = sld [smem:[#allocation10 + $0x1]]
        %v491 = vstv %s490
        %v492 = vmul.f32 %v491, %v486
        %v493 = vadd.f32 %v489, %v492
        %s494 = sld [smem:[#allocation11]]
        %v495 = vstv %s494
        %v496 = vadd.f32 %v493, %v495
        %s497 = sld [smem:[#allocation10 + $0x80]]
        %v498 = vstv %s497
        %v499 = vmul.f32 %v498, %v471
        %s500 = sld [smem:[#allocation10 + $0x81]]
        %v501 = vstv %s500
        %v502 = vmul.f32 %v501, %v486
        %v503 = vadd.f32 %v499, %v502
        %s504 = sld [smem:[#allocation11 + $0x1]]
        %v505 = vstv %s504
        %v506 = vadd.f32 %v503, %v505
        %v507 = vsub.f32 %v496, %v506
        %v508 = vxor.u32 %v507, 2147483648
        %v509 = vmul.f32 %v508, 1.442695
        %v510 = vpow.pop %v509
        %v511 = vadd.f32 %v510, 1.0
        %v512 = vrcp.pop %v511
        %v513 = vmul.f32 1.0, %v512
        %514 = vst [vmem:[%s391] sm:$0xff] %v513
        %v515 = vsub.f32 1.0, %v513
        %s516 = scalar_lea.vmem %s391, 8 [#allocation13]
        %517 = vst [vmem:[%s516] sm:$0xff] %v515
        %s518 = sand.u32 %s182, 1
        %s519 = sand.u32 %s182, 1
        %s520 = smul.addr %s519, 16
        %s521 = scalar_lea.vmem [#allocation13], %s520
        // Predicated region
        $region111: #{model_demo_forward.1} parent=81 // pred_check
          %p522 = pneg %p192
        $region112: #{model_demo_forward.1} parent=81 // pred_check_branch
          %524 = sbr.rel (%p522) target = $region114
        $region113: #{model_demo_forward.1} parent=81 // pred_region
          %s525 = smul.addr %s22, 8
          %s526 = scalar_lea.vmem %s7, %s525
          // Predicated region
          $region115: #{model_demo_forward.1} parent=113 // pred_check
            _
          $region116: #{model_demo_forward.1} parent=113 // pred_check_branch
            %528 = sbr.rel (0) target = $region118
          $region117: #{model_demo_forward.1} parent=113 // pred_region
            // Predicated region
            $region119: #{model_demo_forward.1} parent=117 // pred_check
              _
            $region120: #{model_demo_forward.1} parent=117 // pred_check_branch
              %530 = sbr.rel (0) target = $region122
            $region121: #{model_demo_forward.1} parent=117 // pred_region
              // Predicated region
              $region134: #{model_demo_forward.1} parent=121 // pred_check
                _
              $region135: #{model_demo_forward.1} parent=121 // pred_check_branch
                %547 = sbr.rel (0) target = $region137
              $region136: #{model_demo_forward.1} parent=121 // pred_region
                loop: start=0, step=1, limit=1
                $region138: #{model_demo_forward.1} parent=136 // loop_pre_header
                  _
                $region139: #{model_demo_forward.1} parent=136 // loop_header
                  %s549 = sphi 0, %s553
                  %p550 = scmp.ge.s32.totalorder %s549, 1
                  %s554 = sphi %s521, %s521
                  %s555 = sphi %s526, %s526
                $region140: #{model_demo_forward.1} parent=136 // loop_header_branch
                  %552 = sbr.rel (%p550) target = $region144
                $region141: #{model_demo_forward.1} parent=136 // loop_body
                  %v556 = vld [vmem:[%s554] sm:$0xff]
                  %557 = vst [vmem:[%s555] sm:$0xff] %v556
                  %v558 = vld [vmem:[%s554 + $0x8] sm:$0xff]
                  %559 = vst [vmem:[%s555 + $0x10] sm:$0xff] %v558
                $region142: #{model_demo_forward.1} parent=136 // loop_footer
                  %s553 = sadd.s32 1, %s549
                $region143: #{model_demo_forward.1} parent=136 // loop_footer_branch
                  %548 = sbr.rel target = $region139
                $region144: #{model_demo_forward.1} parent=136 // loop_exit
                  _
              $region137: #{model_demo_forward.1} parent=121 // pred_fallthru
                _
              // Predicated region
              $region145: #{model_demo_forward.1} parent=121 // pred_check
                _
              $region146: #{model_demo_forward.1} parent=121 // pred_check_branch
                %561 = sbr.rel target = $region148
              $region147: #{model_demo_forward.1} parent=121 // pred_region
                _
              $region148: #{model_demo_forward.1} parent=121 // pred_fallthru
                _
            $region122: #{model_demo_forward.1} parent=117 // pred_fallthru
              _
            // Predicated region
            $region123: #{model_demo_forward.1} parent=117 // pred_check
              _
            $region124: #{model_demo_forward.1} parent=117 // pred_check_branch
              %532 = sbr.rel target = $region126
            $region125: #{model_demo_forward.1} parent=117 // pred_region
              loop: start=0, step=1, limit=1
              $region127: #{model_demo_forward.1} parent=125 // loop_pre_header
                _
              $region128: #{model_demo_forward.1} parent=125 // loop_header
                %s535 = sphi 0, %s539
                %p536 = scmp.ge.s32.totalorder %s535, 1
                %s540 = sphi %s521, %s521
                %s541 = sphi %s526, %s526
              $region129: #{model_demo_forward.1} parent=125 // loop_header_branch
                %538 = sbr.rel (%p536) target = $region133
              $region130: #{model_demo_forward.1} parent=125 // loop_body
                %v542 = vld [vmem:[%s540] sm:$0xff]
                %543 = vst [vmem:[%s541] sm:$0xff] %v542
                %v544 = vld [vmem:[%s540 + $0x8] sm:$0xff]
                %545 = vst [vmem:[%s541 + $0x10] sm:$0xff] %v544
              $region131: #{model_demo_forward.1} parent=125 // loop_footer
                %s539 = sadd.s32 1, %s535
              $region132: #{model_demo_forward.1} parent=125 // loop_footer_branch
                %534 = sbr.rel target = $region128
              $region133: #{model_demo_forward.1} parent=125 // loop_exit
                _
            $region126: #{model_demo_forward.1} parent=117 // pred_fallthru
              _
          $region118: #{model_demo_forward.1} parent=113 // pred_fallthru
            _
          %562 = vnop
        $region114: #{model_demo_forward.1} parent=81 // pred_fallthru
          _
      $region82: #{model_demo_forward.1} parent=5 // pred_fallthru
        _
      %p563 = scmp.le.s32.totalorder 2, %s17
      // Predicated region
      $region149: #{model_demo_forward.1} parent=5 // pred_check
        %p564 = pneg %p563
      $region150: #{model_demo_forward.1} parent=5 // pred_check_branch
        %566 = sbr.rel (%p564) target = $region152
      $region151: #{model_demo_forward.1} parent=5 // pred_region
        %s567 = ssub.s32 %s17, 2
        // Predicated region
        $region153: #{model_demo_forward.1} parent=151 // pred_check
          %p568 = pneg %p198
        $region154: #{model_demo_forward.1} parent=151 // pred_check_branch
          %570 = sbr.rel (%p568) target = $region156
        $region155: #{model_demo_forward.1} parent=151 // pred_region
          %s571 = sand.u32 %s183, 1
          %s572 = sand.u32 %s183, 1
          %s573 = smul.addr %s572, 16
          %s574 = scalar_lea.vmem [#allocation13], %s573
        $region156: #{model_demo_forward.1} parent=151 // pred_fallthru
          _
      $region152: #{model_demo_forward.1} parent=5 // pred_fallthru
        _
    $region6: #{model_demo_forward.1} parent=1 // loop_footer
      %s21 = sadd.s32 1, %s17
    $region7: #{model_demo_forward.1} parent=1 // loop_footer_branch
      %16 = sbr.rel target = $region3
    $region8: #{model_demo_forward.1} parent=1 // loop_exit
      _
    %575 = vsyncpa [#allocation4], 1
    %s576 = scalar_lea.sflag [#allocation4], 1
    %577 = vsyncpa %s576, 1
    %578 = vsyncpa [#allocation6], 1
    %579 = vsyncpa [#allocation9], 1
    %580 = vsyncpa [#allocation12], 1

</llo_original>
